<compile_context>
chip_gen: v5e
topology: v5e:2x2
jax: 0.10.0
libtpu: 0.0.40
codegen_flags: <defaults>
</compile_context>

<pallas_src>
import jax
import jax.numpy as jnp
from jax.experimental import pallas as pl
from jax.experimental.pallas import tpu as pltpu


def _round_up(x, m):
    return ((x + m - 1) // m) * m


def _duration_loss_kernel(pred_ref, tgt_ref, len_ref, out_ref):
    """Per-tile masked squared-error partial sum (no loop-carried state)."""
    j = pl.program_id(1)                               # T-tile index

    # `.float()` cast happens here on the VPU (free vs. the HBM DMA).
    pred = pred_ref[...].astype(jnp.float32)           # (tb, tt)
    tgt = tgt_ref[...].astype(jnp.float32)             # (tb, tt)
    lens = len_ref[...]                                # (tb, 1) int32

    tb, tt = pred.shape
    # Global T positions for this tile (iota offset by the T-grid index).
    pos = jax.lax.broadcasted_iota(jnp.int32, (tb, tt), 1) + j * tt
    valid = pos < lens                                 # True where NOT padding

    diff = pred - tgt
    sq = jnp.where(valid, diff * diff, jnp.float32(0.0))

    # One scalar partial per (i, j) tile -> SMEM output block.
    out_ref[0, 0] = jnp.sum(sq)


def duration_loss(dur_pred, dur_target, text_length, lambda_dur=1.0,
                  tile_b=None, tile_t=None):
    """Pallas implementation of DurationLoss.forward.

    dur_pred:    (B, T) float (any float dtype; cast to f32 in-kernel)
    dur_target:  (B, T) float/int (cast to f32 in-kernel, like `.float()`)
    text_length: (B,)   int
    """
    B, T = dur_pred.shape

    # Tile sizes: multiples of (8, 128).  Default caps keep the per-call VMEM
    # footprint (2 inputs x 2 pipeline buffers x tile) at <= ~8 MiB for f32,
    # under the default scoped-VMEM limit on v5e / v6e / v7x.
    tb = tile_b if tile_b is not None else min(_round_up(B, 8), 256)
    tt = tile_t if tile_t is not None else min(_round_up(T, 128), 2048)
    tb = max(8, _round_up(tb, 8))
    tt = max(128, _round_up(tt, 128))

    Bp = _round_up(B, tb)
    Tp = _round_up(T, tt)

    pred = dur_pred
    tgt = dur_target
    lens = text_length.astype(jnp.int32)
    # Zero-pad to exact tile multiples (no-op for aligned production shapes).
    # Padded elements contribute 0: pred=tgt=0 and/or pos >= len (len=0 rows).
    if (Bp, Tp) != (B, T):
        pred = jnp.pad(pred, ((0, Bp - B), (0, Tp - T)))
        tgt = jnp.pad(tgt, ((0, Bp - B), (0, Tp - T)))
    if Bp != B:
        lens = jnp.pad(lens, (0, Bp - B))
    lens2d = lens.reshape(Bp, 1)

    nb, nt = Bp // tb, Tp // tt

    # (nb, nt) per-tile partial sums; both grid axes fully parallel.
    partials = pl.pallas_call(
        _duration_loss_kernel,
        out_shape=jax.ShapeDtypeStruct((nb, nt), jnp.float32),
        grid_spec=pltpu.PrefetchScalarGridSpec(
            num_scalar_prefetch=0,
            grid=(nb, nt),
            in_specs=[
                pl.BlockSpec((tb, tt), lambda i, j: (i, j)),
                pl.BlockSpec((tb, tt), lambda i, j: (i, j)),
                pl.BlockSpec((tb, 1), lambda i, j: (i, 0)),
            ],
            out_specs=pl.BlockSpec(
                (1, 1), lambda i, j: (i, j), memory_space=pltpu.SMEM
            ),
        ),
        compiler_params=pltpu.CompilerParams(
            dimension_semantics=("parallel", "parallel"),
        ),
    )(pred, tgt, lens2d)

    # Tiny epilogue in the wrapper: O(nb*nt) + O(B) scalars.
    numerator = jnp.sum(partials)
    denominator = jnp.sum(text_length.astype(jnp.float32))
    dur_loss = numerator / jnp.maximum(denominator, jnp.float32(1.0))

    loss = {}
    loss["dur_loss"] = dur_loss
    loss["total_loss"] = lambda_dur * dur_loss
    return loss


def _reference(dur_pred, dur_target, text_length, lambda_dur=1.0):
    pred = dur_pred.astype(jnp.float32)
    tgt = dur_target.astype(jnp.float32)
    B, T = pred.shape
    pos = jnp.arange(T)[None, :]
    pad_mask = pos >= text_length[:, None]             # get_mask_from_lengths
    sq = (pred - tgt) ** 2
    sq = jnp.where(pad_mask, 0.0, sq)
    dur_loss = sq.sum() / jnp.sum(text_length).astype(jnp.float32)
    return dur_loss, lambda_dur * dur_loss


if __name__ == "__main__":
    key = jax.random.PRNGKey(0)
    k1, k2, k3 = jax.random.split(key, 3)

    # Case 1: tiny shapes consistent with the module (single-tile grid).
    B, T = 4, 16
    dur_pred = jax.random.normal(k1, (B, T), dtype=jnp.float32) * 2.0
    dur_target = jnp.round(
        jnp.abs(jax.random.normal(k2, (B, T), dtype=jnp.float32)) * 3.0
    )
    text_length = jax.random.randint(k3, (B,), minval=1, maxval=T + 1, dtype=jnp.int32)

    out = duration_loss(dur_pred, dur_target, text_length, lambda_dur=1.0)
    jax.block_until_ready(out["total_loss"])
    ref_dur, ref_total = _reference(dur_pred, dur_target, text_length)
    assert jnp.allclose(out["dur_loss"], ref_dur, rtol=1e-5, atol=1e-5)
    assert jnp.allclose(out["total_loss"], ref_total, rtol=1e-5, atol=1e-5)

    # Case 2: bf16 inputs + multi-tile grid (exercises the per-tile partial
    # sums, the iota offset across T-tiles, and row/column padding).
    k4, k5, k6 = jax.random.split(jax.random.PRNGKey(1), 3)
    B2, T2 = 16, 384
    pred2 = (jax.random.normal(k4, (B2, T2), dtype=jnp.float32) * 2.0).astype(
        jnp.bfloat16
    )
    tgt2 = jnp.round(
        jnp.abs(jax.random.normal(k5, (B2, T2), dtype=jnp.float32)) * 3.0
    ).astype(jnp.bfloat16)
    len2 = jax.random.randint(k6, (B2,), minval=1, maxval=T2 + 1, dtype=jnp.int32)

    out2 = duration_loss(pred2, tgt2, len2, lambda_dur=0.5, tile_b=8, tile_t=128)
    jax.block_until_ready(out2["total_loss"])
    ref2_dur, ref2_total = _reference(pred2, tgt2, len2, lambda_dur=0.5)
    assert jnp.allclose(out2["dur_loss"], ref2_dur, rtol=1e-4, atol=1e-4)
    assert jnp.allclose(out2["total_loss"], ref2_total, rtol=1e-4, atol=1e-4)

    print("KERNEL_OK")
</pallas_src>

<mosaic_0001>
module attributes {stable_mosaic.version = 11 : i64} {
  func.func @_duration_loss_kernel(%arg0: i32, %arg1: i32, %arg2: memref<8x128xf32, #tpu.memory_space<vmem>>, %arg3: memref<8x128xf32, #tpu.memory_space<vmem>>, %arg4: memref<8x1xi32, #tpu.memory_space<vmem>>, %arg5: memref<1x1xf32, #tpu.memory_space<smem>>) attributes {dimension_semantics = [#tpu.dimension_semantics<parallel>, #tpu.dimension_semantics<parallel>], iteration_bounds = array<i64: 1, 1>, scalar_prefetch = 0 : i64, scratch_operands = 0 : i64, tpu.core_type = #tpu.core_type<tc>, window_params = [{transform_indices = @transform_0, window_bounds = array<i64: 8, 128>}, {transform_indices = @transform_1, window_bounds = array<i64: 8, 128>}, {transform_indices = @transform_2, window_bounds = array<i64: 8, 1>}, {transform_indices = @transform_3, window_bounds = array<i64: 1, 1>}]} {
    %c0 = arith.constant 0 : index
    %c0_0 = arith.constant 0 : index
    %0 = vector.load %arg2[%c0, %c0_0] : memref<8x128xf32, #tpu.memory_space<vmem>>, vector<8x128xf32>
    %c0_1 = arith.constant 0 : index
    %c0_2 = arith.constant 0 : index
    %1 = vector.load %arg3[%c0_1, %c0_2] : memref<8x128xf32, #tpu.memory_space<vmem>>, vector<8x128xf32>
    %c0_3 = arith.constant 0 : index
    %c0_4 = arith.constant 0 : index
    %2 = vector.load %arg4[%c0_3, %c0_4] : memref<8x1xi32, #tpu.memory_space<vmem>>, vector<8x1xi32>
    %3 = tpu.iota {dimensions = array<i32: 1>} : vector<8x128xi32>
    %c128_i32 = arith.constant 128 : i32
    %4 = arith.muli %arg1, %c128_i32 : i32
    %5 = vector.broadcast %4 : i32 to vector<8x128xi32>
    %6 = arith.addi %3, %5 : vector<8x128xi32>
    %7 = vector.broadcast %2 : vector<8x1xi32> to vector<8x128xi32>
    %8 = arith.cmpi slt, %6, %7 : vector<8x128xi32>
    %9 = arith.subf %0, %1 : vector<8x128xf32>
    %10 = arith.mulf %9, %9 : vector<8x128xf32>
    %cst = arith.constant 0.000000e+00 : f32
    %11 = vector.broadcast %cst : f32 to vector<8x128xf32>
    %12 = arith.select %8, %10, %11 : vector<8x128xi1>, vector<8x128xf32>
    %13 = vector.shape_cast %12 : vector<8x128xf32> to vector<1x8x128xf32>
    %cst_5 = arith.constant dense<0.000000e+00> : vector<1xf32>
    %14 = vector.multi_reduction <add>, %13, %cst_5 [1, 2] : vector<1x8x128xf32> to vector<1xf32>
    %15 = vector.shape_cast %14 : vector<1xf32> to vector<1x1x1xf32>
    %16 = vector.extract %15[0, 0, 0] : f32 from vector<1x1x1xf32>
    %c0_6 = arith.constant 0 : index
    %c0_7 = arith.constant 0 : index
    %17 = memref.load %arg5[%c0_6, %c0_7] : memref<1x1xf32, #tpu.memory_space<smem>>
    memref.store %16, %arg5[%c0_6, %c0_7] : memref<1x1xf32, #tpu.memory_space<smem>>
    return
  }
  func.func @transform_0(%arg0: i32, %arg1: i32) -> (i32, i32) {
    %c0_i32 = arith.constant 0 : i32
    return %arg0, %arg1 : i32, i32
  }
  func.func @transform_1(%arg0: i32, %arg1: i32) -> (i32, i32) {
    %c0_i32 = arith.constant 0 : i32
    return %arg0, %arg1 : i32, i32
  }
  func.func @transform_2(%arg0: i32, %arg1: i32) -> (i32, i32) {
    %c0_i32 = arith.constant 0 : i32
    %c0_i32_0 = arith.constant 0 : i32
    return %arg0, %c0_i32 : i32, i32
  }
  func.func @transform_3(%arg0: i32, %arg1: i32) -> (i32, i32) {
    %c0_i32 = arith.constant 0 : i32
    return %arg0, %arg1 : i32, i32
  }
}

</mosaic_0001>

<llo_original>
// kernel: tpu_custom_call.1
$region0: #{tpu_custom_call.1}
  #allocation0 [shape = 'u32[]', space=smem, size = 0x4, offset = 0x4, fixed_abs, tag = 'smem constant byte address 0x4 - core index']
  #allocation1 [shape = 'u32[72,128]{1,0:T(1,128)}', space=vmem, size = 0x9000, scoped, tag = 'internal scratch']
  %s0 = inlined_call_operand.vmem [shape: f32[8,128], index: 0, kind: input, shape index: {}]
  %s1 = inlined_call_operand.hbm [shape: f32[8,128], index: 1, kind: input, shape index: {}]
  %s2 = inlined_call_operand.vmem [shape: s32[8,1], index: 2, kind: input, shape index: {}]
  %s3 = inlined_call_operand.hbm [shape: f32[1,1], index: 3, kind: output, shape index: {}]
  %s4 = sld [smem:[#allocation0]]
  $region26: #{tpu_custom_call.1} parent=0
    _
  %s6 = ssub.s32 1, %s4
  %s7 = scalar_select 0, %s6, %s4
  $region1: #{tpu_custom_call.1} parent=0
    #allocation2 [shape = 'u8[4096]{0}', space=vmem, size = 0x1000, scoped, tag = 'input window, operand 1, single buffered']
    #allocation3 [shape = 's32[1]{0}', space=sflag, size = 0x4, scoped, tag = 'scoped memory for tpu_custom_call.1']
    #allocation4 [shape = 's32[1]{0}', space=sflag, size = 0x4, scoped, tag = 'scoped memory for tpu_custom_call.1']
    #allocation5 [shape = 'u8[512]{0}', space=smem, size = 0x200, scoped, tag = 'output window, operand 0, single buffered']
    %8 = vsyncpa [#allocation3], 0
    %9 = vsyncpa [#allocation4], 0
    // Predicated region
    $region2: #{tpu_custom_call.1} parent=1 // pred_check
      _
    $region3: #{tpu_custom_call.1} parent=1 // pred_check_branch
      %11 = sbr.rel (0) target = $region5
    $region4: #{tpu_custom_call.1} parent=1 // pred_region
      _
    $region5: #{tpu_custom_call.1} parent=1 // pred_fallthru
      _
    // Predicated region
    $region6: #{tpu_custom_call.1} parent=1 // pred_check
      _
    $region7: #{tpu_custom_call.1} parent=1 // pred_check_branch
      %13 = sbr.rel (0) target = $region9
    $region8: #{tpu_custom_call.1} parent=1 // pred_region
      %15 = vsyncadd [#allocation3], 0
      %s17 = sshll.u32 %s1, 4
      %s18 = int_to_ptr.hbm [resolvable:$true] %s17
      %s19 = sshll.u32 [#allocation2], 4
      %s20 = int_to_ptr.vmem [resolvable:$true] %s19
      %22 = dma.hbm_to_vmem [thread:$0]  %s18, 128, %s20, [#allocation3]
    $region9: #{tpu_custom_call.1} parent=1 // pred_fallthru
      _
    // Predicated region
    $region10: #{tpu_custom_call.1} parent=1 // pred_check
      _
    $region11: #{tpu_custom_call.1} parent=1 // pred_check_branch
      %24 = sbr.rel (0) target = $region13
    $region12: #{tpu_custom_call.1} parent=1 // pred_region
      _
    $region13: #{tpu_custom_call.1} parent=1 // pred_fallthru
      _
    // Predicated region
    $region14: #{tpu_custom_call.1} parent=1 // pred_check
      _
    $region15: #{tpu_custom_call.1} parent=1 // pred_check_branch
      %26 = sbr.rel (0) target = $region17
    $region16: #{tpu_custom_call.1} parent=1 // pred_region
      %28 = dma.done [#allocation3], 128
    $region17: #{tpu_custom_call.1} parent=1 // pred_fallthru
      _
    %v29 = vld [vmem:[%s0] sm:$0xff]
    %v30 = vld [vmem:[#allocation2] sm:$0xff]
    %v31 = vld [vmem:[%s2] sm:$0xff]
    %v32 = vlaneseq
    %v33 = vand.u32 %v32, 127
    %s34 = smul.u32 0, 128
    %v35 = vstv %s34
    %v36 = vadd.s32 %v33, %v35
    %37 = vset.pattern.permute.xlu0 0
    %38 = vperm.xlu0 %37, %v31
    %v39 = vpop.permute.xlu0 %38
    %vm40 = vcmp.lt.s32.totalorder %v36, %v39
    %v41 = vsub.f32 %v29, %v30
    %v42 = vmul.f32 %v41, %v41
    %v43 = vsel %vm40, %v42, 0.0
    %44 = vadd.xlane.f32.xlu0 %v43
    %v45 = vpop.xlane.xlu0 %44
    %v46 = vrot.slane %v45, 4
    %v47 = vadd.f32 %v45, %v46
    %v48 = vrot.slane %v47, 2
    %v49 = vadd.f32 %v47, %v48
    %v50 = vrot.slane %v49, 1
    %v51 = vadd.f32 %v49, %v50
    %s52 = vtos %v51
    %s53 = scalar_lea.smem [#allocation5], 0
    %54 = sst [smem:[%s53]] %s52
    // Predicated region
    $region18: #{tpu_custom_call.1} parent=1 // pred_check
      _
    $region19: #{tpu_custom_call.1} parent=1 // pred_check_branch
      %56 = sbr.rel (0) target = $region21
    $region20: #{tpu_custom_call.1} parent=1 // pred_region
      %58 = vsyncadd [#allocation4], 0
      %s60 = sshll.u32 %s3, 4
      %s61 = int_to_ptr.hbm [resolvable:$true] %s60
      %63 = dma.smem_to_hbm [#allocation5], 16, %s61, [#allocation4]
    $region21: #{tpu_custom_call.1} parent=1 // pred_fallthru
      _
    // Predicated region
    $region22: #{tpu_custom_call.1} parent=1 // pred_check
      _
    $region23: #{tpu_custom_call.1} parent=1 // pred_check_branch
      %65 = sbr.rel (0) target = $region25
    $region24: #{tpu_custom_call.1} parent=1 // pred_region
      %67 = dma.done [#allocation4], 16
    $region25: #{tpu_custom_call.1} parent=1 // pred_fallthru
      _
    %68 = sfence
    %69 = vsyncpa [#allocation3], 1
    %70 = vsyncpa [#allocation4], 1

</llo_original>
